<compile_context>
chip_gen: v7x
topology: tpu7x:2x2x1
jax: 0.10.0
libtpu: 0.0.40
codegen_flags: <defaults>
</compile_context>

<pallas_src>
import functools

import jax
import jax.numpy as jnp
from jax.experimental import pallas as pl
from jax.experimental.pallas import tpu as pltpu


def _conv1d_kernel(x_ref, xr_ref, w_ref, b_ref, o_ref, carry_ref, *,
                   K, dilation, padding, t_tile, T, fold, halo_blk):
    # x_ref    : (1, C_in, t_tile)   main time window (raw input dtype)
    # xr_ref   : (1, C_in, halo_blk) right halo = head of next window
    # w_ref    : fold -> (C_out, K*C_in) ; else -> (K, C_out, C_in)
    # b_ref    : (C_out, 1) f32
    # o_ref    : (1, C_out, t_tile)
    # carry_ref: (C_in, halo_blk) compute dtype -- last cols of previous tile
    t = pl.program_id(1)
    ts = t * t_tile
    halo = dilation * (K - 1)
    right_need = max(halo - padding, 0)
    need_left = padding > 0
    need_right = right_need > 0
    cdt = carry_ref.dtype                       # compute dtype (bf16 default)

    # Main block: cast + zero everything past the end of the signal.  This
    # implements the conv's right zero-padding in-kernel AND kills the
    # unspecified contents of the partial last block.
    x_main = x_ref[0].astype(cdt)                               # (C_in, t_tile)
    col = jax.lax.broadcasted_iota(jnp.int32, x_main.shape, 1)
    x_main = jnp.where(col < (T - ts), x_main, jnp.zeros_like(x_main))

    left_ctx = None
    if need_left:
        @pl.when(t == 0)
        def _():  # left conv zero padding for the first tile of each batch
            carry_ref[...] = jnp.zeros_like(carry_ref)
        left_ctx = carry_ref[...]                               # (C_in, halo_blk)

    x_right = None
    if need_right:
        x_right = xr_ref[0].astype(cdt)                         # (C_in, halo_blk)
        colr = jax.lax.broadcasted_iota(jnp.int32, x_right.shape, 1)
        x_right = jnp.where(colr < (T - (ts + t_tile)), x_right,
                            jnp.zeros_like(x_right))

    if fold:
        # Small contraction: build the (C_in, t_tile + halo) slab, stack the K
        # shifted windows along the contraction dim -> a single matmul.
        pieces = []
        if need_left:
            pieces.append(left_ctx[:, halo_blk - padding:])     # (C_in, padding)
        pieces.append(x_main)
        if need_right:
            pieces.append(x_right[:, :right_need])              # (C_in, right_need)
        slab = pieces[0] if len(pieces) == 1 else jnp.concatenate(pieces, -1)
        if K == 1:
            stack = slab
        else:
            stack = jnp.concatenate(
                [slab[:, k * dilation:k * dilation + t_tile] for k in range(K)],
                axis=0)                                         # (K*C_in, t_tile)
        acc = jnp.dot(w_ref[...], stack, preferred_element_type=jnp.float32)
    else:
        # Large contraction: K per-tap matmuls on the aligned main block; the
        # per-tap shift is applied to the (C_out, t_tile) *product*, with tiny
        # boundary matmuls on the carried left context / right halo block.
        # TODO(synk): for C_out >> C_in, shifting the activations instead
        # (pltpu.roll on the slab) would move less data.
        acc = None
        for k in range(K):                                      # static, small K
            s = k * dilation - padding
            pm = jnp.dot(w_ref[k], x_main, preferred_element_type=jnp.float32)
            if s == 0:
                contrib = pm
            elif s < 0:
                lprod = jnp.dot(w_ref[k], left_ctx,
                                preferred_element_type=jnp.float32)
                contrib = jnp.concatenate(
                    [lprod[:, halo_blk + s:], pm[:, :t_tile + s]], axis=-1)
            else:
                rprod = jnp.dot(w_ref[k], x_right,
                                preferred_element_type=jnp.float32)
                contrib = jnp.concatenate([pm[:, s:], rprod[:, :s]], axis=-1)
            acc = contrib if acc is None else acc + contrib

    acc = acc + b_ref[...]                                      # (C_out,1) bcast
    o_ref[0] = acc.astype(o_ref.dtype)

    if need_left:
        # Carry the last halo_blk columns of this tile for the next time tile.
        carry_ref[...] = x_main[:, t_tile - halo_blk:]


def conv_norm_forward(x, weight, bias=None, *, stride=1, padding=None,
                      dilation=1, compute_dtype=jnp.bfloat16):
    """Pallas implementation of ConvNorm.forward (Conv1d, stride=1)."""
    assert stride == 1, "kernel implements the module default stride=1"
    B, C_in, T = x.shape
    C_out, C_in_w, K = weight.shape
    assert C_in == C_in_w
    if padding is None:
        assert K % 2 == 1
        padding = int(dilation * (K - 1) / 2)
    halo = dilation * (K - 1)
    right_need = max(halo - padding, 0)
    HALO_BLK = 128
    assert padding <= HALO_BLK and right_need <= HALO_BLK, \
        "TODO(synk): support halos wider than 128 columns"
    T_out = T + 2 * padding - halo
    assert T_out >= 1
    if bias is None:
        bias = jnp.zeros((C_out,), jnp.float32)

    out_dtype = x.dtype
    x_isz = jnp.dtype(x.dtype).itemsize
    o_isz = jnp.dtype(out_dtype).itemsize
    c_isz = jnp.dtype(compute_dtype).itemsize

    def _rup(v, m):
        return -(-v // m) * m

    # ---- time tiling: lane-dense multiples of 128, as big as VMEM allows ----
    base = _rup(T_out, 128)
    t_tile = min(1024, base)
    if B == 1 and base > 128:
        # Keep >= 2 grid steps so both v7x TensorCores / the pipeline get work.
        t_tile = min(t_tile, max(128, _rup(-(-T_out // 2), 128)))

    def footprint(tt):
        return (2 * C_in * tt * x_isz            # main block (double-buffered)
                + 2 * C_in * HALO_BLK * x_isz    # right-halo block
                + 2 * C_out * tt * o_isz         # output block
                + 2 * C_out * C_in * K * c_isz   # weight
                + C_in * HALO_BLK * c_isz        # carry scratch
                + C_in * (tt + 2 * HALO_BLK) * c_isz   # slab / shifted copies
                + (K + 2) * C_out * tt * 4)      # products / f32 accumulator

    budget = 40 * 1024 * 1024
    while t_tile > 128 and footprint(t_tile) > budget:
        t_tile -= 128
    num_t = -(-T_out // t_tile)
    vmem_limit = int(min(max(2 * footprint(t_tile), 32 * 1024 * 1024),
                         48 * 1024 * 1024))

    # ---- weight / bias layout ----
    # TODO(synk): v5e's MXU is only 128 deep -> fold threshold of 128 there.
    fold = (K * C_in) <= 256
    if fold:
        # W2[o, k*C_in + i] = W[o, i, k]  (C_in on lanes, K folded in)
        w_k = jnp.transpose(weight, (0, 2, 1)).reshape(
            C_out, K * C_in).astype(compute_dtype)
        w_spec = pl.BlockSpec((C_out, K * C_in), lambda b, t: (0, 0))
    else:
        # (K, C_out, C_in): per-tap tiles, cheap static leading-dim index.
        w_k = jnp.transpose(weight, (2, 0, 1)).astype(compute_dtype)
        w_spec = pl.BlockSpec((K, C_out, C_in), lambda b, t: (0, 0, 0))
    bias2d = bias.astype(jnp.float32).reshape(C_out, 1)

    # Clamp input time-block indices: a clamped block is always fully masked
    # in-kernel, so correctness never depends on out-of-range block contents.
    n_mblk = max(1, -(-T // t_tile))
    n_rblk = max(1, -(-T // HALO_BLK))
    r_step = t_tile // HALO_BLK

    kernel = functools.partial(
        _conv1d_kernel, K=K, dilation=dilation, padding=padding,
        t_tile=t_tile, T=T, fold=fold, halo_blk=HALO_BLK)

    flops = 2 * B * C_out * C_in * K * T_out
    bytes_accessed = int(B * C_in * T * x_isz + w_k.size * c_isz
                         + bias2d.size * 4 + B * C_out * T_out * o_isz)

    dims = ("parallel", "arbitrary") if padding > 0 else ("parallel", "parallel")

    out = pl.pallas_call(
        kernel,
        out_shape=jax.ShapeDtypeStruct((B, C_out, T_out), out_dtype),
        grid_spec=pltpu.PrefetchScalarGridSpec(
            num_scalar_prefetch=0,
            grid=(B, num_t),
            in_specs=[
                # main time window of this tile
                pl.BlockSpec((1, C_in, t_tile),
                             lambda b, t: (b, 0, jnp.minimum(t, n_mblk - 1))),
                # right halo: first HALO_BLK columns after this tile
                pl.BlockSpec((1, C_in, HALO_BLK),
                             lambda b, t: (b, 0, jnp.minimum((t + 1) * r_step,
                                                             n_rblk - 1))),
                w_spec,
                pl.BlockSpec((C_out, 1), lambda b, t: (0, 0)),
            ],
            out_specs=pl.BlockSpec((1, C_out, t_tile), lambda b, t: (b, 0, t)),
            scratch_shapes=[pltpu.VMEM((C_in, HALO_BLK), compute_dtype)],
        ),
        compiler_params=pltpu.CompilerParams(
            dimension_semantics=dims, vmem_limit_bytes=vmem_limit),
        cost_estimate=pl.CostEstimate(flops=flops, transcendentals=0,
                                      bytes_accessed=bytes_accessed),
    )(x, x, w_k, bias2d)
    return out


def xavier_uniform(key, shape, gain=1.0):
    # Matches torch.nn.init.xavier_uniform_ for a conv weight (C_out, C_in, K).
    c_out, c_in, k = shape
    fan_in, fan_out = c_in * k, c_out * k
    bound = gain * (6.0 / (fan_in + fan_out)) ** 0.5
    return jax.random.uniform(key, shape, jnp.float32, -bound, bound)


def _reference(x, weight, bias, *, padding, dilation,
               compute_dtype=jnp.bfloat16):
    # Reference uses the same compute-dtype-rounded inputs the kernel feeds the
    # MXU (f32 accumulation), so tolerances stay tight.  NOTE: bf16 inputs are
    # a deliberate precision drop vs a pure-f32 PyTorch Conv1d.
    C_out = weight.shape[0]
    y = jax.lax.conv_general_dilated(
        x.astype(compute_dtype), weight.astype(compute_dtype),
        window_strides=(1,), padding=[(padding, padding)],
        rhs_dilation=(dilation,), dimension_numbers=("NCH", "OIH", "NCH"),
        preferred_element_type=jnp.float32)
    return (y + bias.astype(jnp.float32).reshape(1, C_out, 1)).astype(x.dtype)


def _run_case(key, B, C_in, C_out, T, K, dilation):
    k_x, k_w, k_b = jax.random.split(key, 3)
    x = jax.random.normal(k_x, (B, C_in, T), jnp.float32)
    w = xavier_uniform(k_w, (C_out, C_in, K), gain=1.0)   # 'linear' gain = 1
    b_bound = 1.0 / (C_in * K) ** 0.5
    b = jax.random.uniform(k_b, (C_out,), jnp.float32, -b_bound, b_bound)
    padding = int(dilation * (K - 1) / 2)
    out = jax.block_until_ready(conv_norm_forward(x, w, b, dilation=dilation))
    ref = _reference(x, w, b, padding=padding, dilation=dilation)
    T_out = T + 2 * padding - dilation * (K - 1)
    assert out.shape == (B, C_out, T_out), out.shape
    err = float(jnp.max(jnp.abs(out - ref)))
    assert jnp.allclose(out, ref, atol=1e-3), err
    return err


if __name__ == "__main__":
    root = jax.random.PRNGKey(0)
    keys = jax.random.split(root, 4)

    # 1) Small channels, K=3 (fold path), single time tile.
    _run_case(keys[0], B=2, C_in=4, C_out=8, T=16, K=3, dilation=1)

    # 2) Wide channels + dilation=2 (non-fold / product-shift path).
    _run_case(keys[1], B=1, C_in=256, C_out=16, T=64, K=3, dilation=2)

    # 3) Module default kernel_size=1 (pointwise, no halo / no carry).
    _run_case(keys[2], B=2, C_in=4, C_out=8, T=16, K=1, dilation=1)

    # 4) Multi-tile time axis (exercises the carried left halo + masked edges).
    _run_case(keys[3], B=2, C_in=8, C_out=4, T=300, K=5, dilation=1)

    print("KERNEL_OK")
</pallas_src>

<mosaic_0001>
module attributes {stable_mosaic.version = 11 : i64} {
  func.func @_conv1d_kernel(%arg0: i32, %arg1: i32, %arg2: memref<1x4x128xf32, #tpu.memory_space<vmem>>, %arg3: memref<1x4x128xf32, #tpu.memory_space<vmem>>, %arg4: memref<8x12xbf16, #tpu.memory_space<vmem>>, %arg5: memref<8x1xf32, #tpu.memory_space<vmem>>, %arg6: memref<1x8x128xf32, #tpu.memory_space<vmem>>, %arg7: memref<4x128xbf16, #tpu.memory_space<vmem>>) attributes {dimension_semantics = [#tpu.dimension_semantics<parallel>, #tpu.dimension_semantics<arbitrary>], iteration_bounds = array<i64: 2, 1>, scalar_prefetch = 0 : i64, scratch_operands = 1 : i64, tpu.core_type = #tpu.core_type<tc>, window_params = [{transform_indices = @transform_0, window_bounds = array<i64: 1, 4, 128>}, {transform_indices = @transform_1, window_bounds = array<i64: 1, 4, 128>}, {pipeline_mode = #tpu.pipeline_mode<synchronous>, transform_indices = @transform_2, window_bounds = array<i64: 8, 12>}, {pipeline_mode = #tpu.pipeline_mode<synchronous>, transform_indices = @transform_3, window_bounds = array<i64: 8, 1>}, {transform_indices = @transform_4, window_bounds = array<i64: 1, 8, 128>}]} {
    %c128_i32 = arith.constant 128 : i32
    %0 = arith.muli %arg1, %c128_i32 : i32
    %c0 = arith.constant 0 : index
    %c0_0 = arith.constant 0 : index
    %c0_1 = arith.constant 0 : index
    %1 = vector.load %arg2[%c0, %c0_0, %c0_1] : memref<1x4x128xf32, #tpu.memory_space<vmem>>, vector<1x4x128xf32>
    %2 = vector.shape_cast %1 : vector<1x4x128xf32> to vector<4x128xf32>
    %3 = arith.truncf %2 : vector<4x128xf32> to vector<4x128xbf16>
    %4 = tpu.iota {dimensions = array<i32: 1>} : vector<4x128xi32>
    %c16_i32 = arith.constant 16 : i32
    %5 = arith.subi %c16_i32, %0 : i32
    %6 = vector.broadcast %5 : i32 to vector<4x128xi32>
    %7 = arith.cmpi slt, %4, %6 : vector<4x128xi32>
    %cst = arith.constant 0.000000e+00 : bf16
    %8 = vector.broadcast %cst : bf16 to vector<4x128xbf16>
    %9 = arith.select %7, %3, %8 : vector<4x128xi1>, vector<4x128xbf16>
    %c0_i32 = arith.constant 0 : i32
    %10 = arith.cmpi eq, %arg1, %c0_i32 : i32
    %11 = arith.extui %10 : i1 to i32
    %c0_i32_2 = arith.constant 0 : i32
    %12 = arith.cmpi ne, %11, %c0_i32_2 : i32
    scf.if %12 {
      %cst_21 = arith.constant 0.000000e+00 : bf16
      %40 = vector.broadcast %cst_21 : bf16 to vector<4x128xbf16>
      %c0_22 = arith.constant 0 : index
      %c0_23 = arith.constant 0 : index
      %41 = vector.load %arg7[%c0_22, %c0_23] : memref<4x128xbf16, #tpu.memory_space<vmem>>, vector<4x128xbf16>
      tpu.vector_store %arg7[%c0_22, %c0_23], %40 {strides = array<i32>} : memref<4x128xbf16, #tpu.memory_space<vmem>>, vector<4x128xbf16>,
    } else {
    }
    %c0_3 = arith.constant 0 : index
    %c0_4 = arith.constant 0 : index
    %13 = vector.load %arg7[%c0_3, %c0_4] : memref<4x128xbf16, #tpu.memory_space<vmem>>, vector<4x128xbf16>
    %c0_5 = arith.constant 0 : index
    %c0_6 = arith.constant 0 : index
    %c0_7 = arith.constant 0 : index
    %14 = vector.load %arg3[%c0_5, %c0_6, %c0_7] : memref<1x4x128xf32, #tpu.memory_space<vmem>>, vector<1x4x128xf32>
    %15 = vector.shape_cast %14 : vector<1x4x128xf32> to vector<4x128xf32>
    %16 = arith.truncf %15 : vector<4x128xf32> to vector<4x128xbf16>
    %17 = tpu.iota {dimensions = array<i32: 1>} : vector<4x128xi32>
    %c128_i32_8 = arith.constant 128 : i32
    %18 = arith.addi %0, %c128_i32_8 : i32
    %c16_i32_9 = arith.constant 16 : i32
    %19 = arith.subi %c16_i32_9, %18 : i32
    %20 = vector.broadcast %19 : i32 to vector<4x128xi32>
    %21 = arith.cmpi slt, %17, %20 : vector<4x128xi32>
    %cst_10 = arith.constant 0.000000e+00 : bf16
    %22 = vector.broadcast %cst_10 : bf16 to vector<4x128xbf16>
    %23 = arith.select %21, %16, %22 : vector<4x128xi1>, vector<4x128xbf16>
    %24 = vector.extract_strided_slice %13 {offsets = [0, 127], sizes = [4, 1], strides = [1, 1]} : vector<4x128xbf16> to vector<4x1xbf16>
    %25 = vector.extract_strided_slice %23 {offsets = [0, 0], sizes = [4, 1], strides = [1, 1]} : vector<4x128xbf16> to vector<4x1xbf16>
    %26 = tpu.concatenate %24, %9, %25 in 1 : vector<4x1xbf16>, vector<4x128xbf16>, vector<4x1xbf16> -> vector<4x130xbf16>
    %27 = vector.extract_strided_slice %26 {offsets = [0, 0], sizes = [4, 128], strides = [1, 1]} : vector<4x130xbf16> to vector<4x128xbf16>
    %28 = vector.extract_strided_slice %26 {offsets = [0, 1], sizes = [4, 128], strides = [1, 1]} : vector<4x130xbf16> to vector<4x128xbf16>
    %29 = vector.extract_strided_slice %26 {offsets = [0, 2], sizes = [4, 128], strides = [1, 1]} : vector<4x130xbf16> to vector<4x128xbf16>
    %30 = tpu.concatenate %27, %28, %29 in 0 : vector<4x128xbf16>, vector<4x128xbf16>, vector<4x128xbf16> -> vector<12x128xbf16>
    %c0_11 = arith.constant 0 : index
    %c0_12 = arith.constant 0 : index
    %31 = vector.load %arg4[%c0_11, %c0_12] : memref<8x12xbf16, #tpu.memory_space<vmem>>, vector<8x12xbf16>
    %cst_13 = arith.constant dense<0.000000e+00> : vector<8x128xf32>
    %32 = tpu.matmul %31, %30, %cst_13 {dimension_numbers = #tpu.dot_dimension_numbers<[1], [0], [0], [1], [0, 0, 1, 1], [], []>} : vector<8x12xbf16>, vector<12x128xbf16>, vector<8x128xf32> -> vector<8x128xf32>
    %c0_14 = arith.constant 0 : index
    %c0_15 = arith.constant 0 : index
    %33 = vector.load %arg5[%c0_14, %c0_15] : memref<8x1xf32, #tpu.memory_space<vmem>>, vector<8x1xf32>
    %34 = vector.broadcast %33 : vector<8x1xf32> to vector<8x128xf32>
    %35 = arith.addf %32, %34 : vector<8x128xf32>
    %c0_16 = arith.constant 0 : index
    %c0_17 = arith.constant 0 : index
    %c0_18 = arith.constant 0 : index
    %36 = vector.load %arg6[%c0_16, %c0_17, %c0_18] : memref<1x8x128xf32, #tpu.memory_space<vmem>>, vector<1x8x128xf32>
    %37 = vector.shape_cast %36 : vector<1x8x128xf32> to vector<8x128xf32>
    %38 = vector.shape_cast %35 : vector<8x128xf32> to vector<1x8x128xf32>
    tpu.vector_store %arg6[%c0_16, %c0_17, %c0_18], %38 {strides = array<i32>} : memref<1x8x128xf32, #tpu.memory_space<vmem>>, vector<1x8x128xf32>,
    %c0_19 = arith.constant 0 : index
    %c0_20 = arith.constant 0 : index
    %39 = vector.load %arg7[%c0_19, %c0_20] : memref<4x128xbf16, #tpu.memory_space<vmem>>, vector<4x128xbf16>
    tpu.vector_store %arg7[%c0_19, %c0_20], %9 {strides = array<i32>} : memref<4x128xbf16, #tpu.memory_space<vmem>>, vector<4x128xbf16>,
    return
  }
  func.func @transform_0(%arg0: i32, %arg1: i32) -> (i32, i32, i32) {
    %c0_i32 = arith.constant 0 : i32
    %0 = arith.minsi %arg1, %c0_i32 : i32
    %c0_i32_0 = arith.constant 0 : i32
    %c0_i32_1 = arith.constant 0 : i32
    return %arg0, %c0_i32_0, %0 : i32, i32, i32
  }
  func.func @transform_1(%arg0: i32, %arg1: i32) -> (i32, i32, i32) {
    %c1_i32 = arith.constant 1 : i32
    %0 = arith.addi %arg1, %c1_i32 : i32
    %c1_i32_0 = arith.constant 1 : i32
    %1 = arith.muli %0, %c1_i32_0 : i32
    %c0_i32 = arith.constant 0 : i32
    %2 = arith.minsi %1, %c0_i32 : i32
    %c0_i32_1 = arith.constant 0 : i32
    %c0_i32_2 = arith.constant 0 : i32
    return %arg0, %c0_i32_1, %2 : i32, i32, i32
  }
  func.func @transform_2(%arg0: i32, %arg1: i32) -> (i32, i32) {
    %c0_i32 = arith.constant 0 : i32
    %c0_i32_0 = arith.constant 0 : i32
    %c0_i32_1 = arith.constant 0 : i32
    return %c0_i32, %c0_i32_0 : i32, i32
  }
  func.func @transform_3(%arg0: i32, %arg1: i32) -> (i32, i32) {
    %c0_i32 = arith.constant 0 : i32
    %c0_i32_0 = arith.constant 0 : i32
    %c0_i32_1 = arith.constant 0 : i32
    return %c0_i32, %c0_i32_0 : i32, i32
  }
  func.func @transform_4(%arg0: i32, %arg1: i32) -> (i32, i32, i32) {
    %c0_i32 = arith.constant 0 : i32
    %c0_i32_0 = arith.constant 0 : i32
    return %arg0, %c0_i32, %arg1 : i32, i32, i32
  }
}

</mosaic_0001>

<llo_original>
// kernel: tpu_custom_call.1
$region0: #{tpu_custom_call.1}
  #allocation0 [shape = 'u32[]', space=smem, size = 0x4, offset = 0x4, fixed_abs, tag = 'smem constant byte address 0x4 - core index']
  #allocation1 [shape = 'u32[144,128]{1,0:T(1,128)}', space=vmem, size = 0x12000, scoped, tag = 'internal scratch']
  #allocation2 [shape = 'bf16[4,128]{1,0:T(4,128)(2,1)}', space=vmem, size = 0x400, scoped, tag = 'scratch operand']
  %s0 = inlined_call_operand.vmem [shape: f32[2,4,16], index: 0, kind: input, shape index: {}]
  %s1 = inlined_call_operand.hbm [shape: f32[2,4,16], index: 1, kind: input, shape index: {}]
  %s2 = inlined_call_operand.vmem [shape: bf16[8,12], index: 2, kind: input, shape index: {}]
  %s3 = inlined_call_operand.vmem [shape: f32[8,1], index: 3, kind: input, shape index: {}]
  %s4 = inlined_call_operand.hbm [shape: f32[2,8,16], index: 4, kind: output, shape index: {}]
  %s5 = sld [smem:[#allocation0]]
  $region57: #{tpu_custom_call.1} parent=0
    _
  %s7 = ssub.s32 1, %s5
  %s8 = scalar_select 0, %s7, %s5
  $region1: #{tpu_custom_call.1} parent=0
    #allocation3 [shape = 'u8[4096]{0}', space=vmem, size = 0x1000, scoped, tag = 'input window, operand 1']
    #allocation4 [shape = 's32[2]{0}', space=sflag, size = 0x8, scoped, tag = 'scoped memory for tpu_custom_call.1']
    #allocation5 [shape = 's32[2]{0}', space=sflag, size = 0x8, scoped, tag = 'scoped memory for tpu_custom_call.1']
    #allocation6 [shape = 'u8[8192]{0}', space=vmem, size = 0x2000, scoped, tag = 'output window, operand 0']
    %9 = vsyncpa [#allocation4], 0
    %s10 = scalar_lea.sflag [#allocation4], 1
    %11 = vsyncpa %s10, 0
    %12 = vsyncpa [#allocation5], 0
    %s13 = scalar_lea.sflag [#allocation5], 1
    %14 = vsyncpa %s13, 0
    loop: start=0, step=1, limit=4
    $region2: #{tpu_custom_call.1} parent=1 // loop_pre_header
      _
    $region3: #{tpu_custom_call.1} parent=1 // loop_header
      %s16 = sphi 0, %s20
      %p17 = scmp.ge.s32.totalorder %s16, 4
      %s23 = sphi 0, %s35
      %s24 = sphi 0, %s31
      %s25 = sphi 0, %s23
      %s26 = sphi 0, %s24
      %s27 = sphi 0, %s25
      %s28 = sphi 0, %s26
      %s44 = sphi 0, %s46
      %s47 = sphi 0, %s44
      %s48 = sphi 0, %s47
      %s64 = sphi 0, %s48
      %s78 = sphi 0, %s80
      %s81 = sphi 0, %s78
      %s82 = sphi 0, %s81
      %s98 = sphi 0, %s82
      %s102 = sphi 0, %s102
      %s104 = sphi 0, %s102
      %s105 = sphi 0, %s104
      %s119 = sphi 0, %s105
      %s123 = sphi 0, %s123
      %s125 = sphi 0, %s123
      %s126 = sphi 0, %s125
      %s140 = sphi 0, %s126
      %s148 = sphi 0, %s150
      %s151 = sphi 0, %s148
      %s152 = sphi 0, %s151
      %s168 = sphi 0, %s152
    $region4: #{tpu_custom_call.1} parent=1 // loop_header_branch
      %19 = sbr.rel (%p17) target = $region8
    $region5: #{tpu_custom_call.1} parent=1 // loop_body
      %s21 = ssub.s32 %s16, 1
      %s22 = ssub.s32 %s16, 2
      %s29 = sadd.s32 1, %s24
      %p30 = scmp.ge.s32.totalorder %s29, 1
      %s31 = scalar_select %p30, 0, %s29
      %s32 = sadd.s32 1, %s23
      %s33 = scalar_select %p30, %s32, %s23
      %p34 = scmp.ge.s32.totalorder %s33, 2
      %s35 = scalar_select %p34, 0, %s33
      %p36 = scmp.lt.s32.totalorder %s24, 0
      %s37 = scalar_select %p36, %s24, 0
      %p38 = scmp.lt.s32.totalorder %s31, 0
      %s39 = scalar_select %p38, %s31, 0
      %s40 = ssub.s32 %s23, %s35
      %s41 = ssub.s32 %s37, %s39
      %s42 = sor.u32 %s40, %s41
      %p43 = scmp.eq.s32.totalorder %s42, 0
      %s45 = sadd.s32 %s44, 1
      %s46 = scalar_select %p43, %s44, %s45
      %p49 = pneg %p43
      %p50 = scmp.eq.s32.totalorder %s16, 1
      %p51 = por %p49, %p50
      %p52 = scmp.ne.s32.totalorder %s44, %s47
      %p53 = scmp.eq.s32.totalorder %s16, 0
      %p54 = por %p52, %p53
      %p55 = scmp.ne.s32.totalorder %s44, %s47
      %p56 = scmp.eq.s32.totalorder %s21, 1
      %p57 = por %p55, %p56
      %p58 = scmp.ne.s32.totalorder %s47, %s48
      %p59 = scmp.eq.s32.totalorder %s21, 0
      %p60 = por %p58, %p59
      %p61 = scmp.ne.s32.totalorder %s47, %s48
      %p62 = scmp.eq.s32.totalorder %s22, 1
      %p63 = por %p61, %p62
      %p65 = scmp.ne.s32.totalorder %s48, %s64
      %p66 = scmp.eq.s32.totalorder %s22, 0
      %p67 = por %p65, %p66
      %s68 = sadd.s32 %s24, 1
      %p69 = scmp.lt.s32.totalorder %s68, 0
      %s70 = scalar_select %p69, %s68, 0
      %s71 = sadd.s32 %s31, 1
      %p72 = scmp.lt.s32.totalorder %s71, 0
      %s73 = scalar_select %p72, %s71, 0
      %s74 = ssub.s32 %s23, %s35
      %s75 = ssub.s32 %s70, %s73
      %s76 = sor.u32 %s74, %s75
      %p77 = scmp.eq.s32.totalorder %s76, 0
      %s79 = sadd.s32 %s78, 1
      %s80 = scalar_select %p77, %s78, %s79
      %p83 = pneg %p77
      %p84 = scmp.eq.s32.totalorder %s16, 1
      %p85 = por %p83, %p84
      %p86 = scmp.ne.s32.totalorder %s78, %s81
      %p87 = scmp.eq.s32.totalorder %s16, 0
      %p88 = por %p86, %p87
      %p89 = scmp.ne.s32.totalorder %s78, %s81
      %p90 = scmp.eq.s32.totalorder %s21, 1
      %p91 = por %p89, %p90
      %p92 = scmp.ne.s32.totalorder %s81, %s82
      %p93 = scmp.eq.s32.totalorder %s21, 0
      %p94 = por %p92, %p93
      %p95 = scmp.ne.s32.totalorder %s81, %s82
      %p96 = scmp.eq.s32.totalorder %s22, 1
      %p97 = por %p95, %p96
      %p99 = scmp.ne.s32.totalorder %s82, %s98
      %p100 = scmp.eq.s32.totalorder %s22, 0
      %p101 = por %p99, %p100
      %s103 = sadd.s32 %s102, 1
      %p106 = scmp.eq.s32.totalorder %s16, 1
      %p107 = scmp.ne.s32.totalorder %s102, %s104
      %p108 = scmp.eq.s32.totalorder %s16, 0
      %p109 = por %p107, %p108
      %p110 = scmp.ne.s32.totalorder %s102, %s104
      %p111 = scmp.eq.s32.totalorder %s21, 1
      %p112 = por %p110, %p111
      %p113 = scmp.ne.s32.totalorder %s104, %s105
      %p114 = scmp.eq.s32.totalorder %s21, 0
      %p115 = por %p113, %p114
      %p116 = scmp.ne.s32.totalorder %s104, %s105
      %p117 = scmp.eq.s32.totalorder %s22, 1
      %p118 = por %p116, %p117
      %p120 = scmp.ne.s32.totalorder %s105, %s119
      %p121 = scmp.eq.s32.totalorder %s22, 0
      %p122 = por %p120, %p121
      %s124 = sadd.s32 %s123, 1
      %p127 = scmp.eq.s32.totalorder %s16, 1
      %p128 = scmp.ne.s32.totalorder %s123, %s125
      %p129 = scmp.eq.s32.totalorder %s16, 0
      %p130 = por %p128, %p129
      %p131 = scmp.ne.s32.totalorder %s123, %s125
      %p132 = scmp.eq.s32.totalorder %s21, 1
      %p133 = por %p131, %p132
      %p134 = scmp.ne.s32.totalorder %s125, %s126
      %p135 = scmp.eq.s32.totalorder %s21, 0
      %p136 = por %p134, %p135
      %p137 = scmp.ne.s32.totalorder %s125, %s126
      %p138 = scmp.eq.s32.totalorder %s22, 1
      %p139 = por %p137, %p138
      %p141 = scmp.ne.s32.totalorder %s126, %s140
      %p142 = scmp.eq.s32.totalorder %s22, 0
      %p143 = por %p141, %p142
      %s144 = ssub.s32 %s23, %s35
      %s145 = ssub.s32 %s24, %s31
      %s146 = sor.u32 %s144, %s145
      %p147 = scmp.eq.s32.totalorder %s146, 0
      %s149 = sadd.s32 %s148, 1
      %s150 = scalar_select %p147, %s148, %s149
      %p153 = pneg %p147
      %p154 = scmp.eq.s32.totalorder %s16, 1
      %p155 = por %p153, %p154
      %p156 = scmp.ne.s32.totalorder %s148, %s151
      %p157 = scmp.eq.s32.totalorder %s16, 0
      %p158 = por %p156, %p157
      %p159 = scmp.ne.s32.totalorder %s148, %s151
      %p160 = scmp.eq.s32.totalorder %s21, 1
      %p161 = por %p159, %p160
      %p162 = scmp.ne.s32.totalorder %s151, %s152
      %p163 = scmp.eq.s32.totalorder %s21, 0
      %p164 = por %p162, %p163
      %p165 = scmp.ne.s32.totalorder %s151, %s152
      %p166 = scmp.eq.s32.totalorder %s22, 1
      %p167 = por %p165, %p166
      %p169 = scmp.ne.s32.totalorder %s152, %s168
      %p170 = scmp.eq.s32.totalorder %s22, 0
      %p171 = por %p169, %p170
      %p172 = scmp.le.s32.totalorder 1, %s16
      %p173 = scmp.lt.s32.totalorder %s16, 3
      %p174 = pnand %p172, %p173
      %p175 = pneg %p174
      // Predicated region
      $region9: #{tpu_custom_call.1} parent=5 // pred_check
        _
      $region10: #{tpu_custom_call.1} parent=5 // pred_check_branch
        %177 = sbr.rel (%p174) target = $region12
      $region11: #{tpu_custom_call.1} parent=5 // pred_region
        %s178 = ssub.s32 %s16, 1
        // Predicated region
        $region13: #{tpu_custom_call.1} parent=11 // pred_check
          %p179 = pneg %p115
        $region14: #{tpu_custom_call.1} parent=11 // pred_check_branch
          %181 = sbr.rel (%p179) target = $region16
        $region15: #{tpu_custom_call.1} parent=11 // pred_region
          _
        $region16: #{tpu_custom_call.1} parent=11 // pred_fallthru
          _
        // Predicated region
        $region17: #{tpu_custom_call.1} parent=11 // pred_check
          %p182 = pneg %p136
        $region18: #{tpu_custom_call.1} parent=11 // pred_check_branch
          %184 = sbr.rel (%p182) target = $region20
        $region19: #{tpu_custom_call.1} parent=11 // pred_region
          _
        $region20: #{tpu_custom_call.1} parent=11 // pred_fallthru
          _
      $region12: #{tpu_custom_call.1} parent=5 // pred_fallthru
        _
      %p185 = scmp.lt.s32.totalorder %s16, 2
      // Predicated region
      $region21: #{tpu_custom_call.1} parent=5 // pred_check
        %p186 = pneg %p185
      $region22: #{tpu_custom_call.1} parent=5 // pred_check_branch
        %188 = sbr.rel (%p186) target = $region24
      $region23: #{tpu_custom_call.1} parent=5 // pred_region
        // Predicated region
        $region25: #{tpu_custom_call.1} parent=23 // pred_check
          %p189 = pneg %p54
        $region26: #{tpu_custom_call.1} parent=23 // pred_check_branch
          %191 = sbr.rel (%p189) target = $region28
        $region27: #{tpu_custom_call.1} parent=23 // pred_region
          %p192 = scmp.lt.s32.totalorder %s24, 0
          %s193 = scalar_select %p192, %s24, 0
          %p194 = scmp.lt.s32.totalorder %s23, 1
          %s195 = scalar_select %p194, %s23, 1
          %p196 = scmp.lt.s32.totalorder %s193, 0
          %s197 = scalar_select %p196, %s193, 0
          %s198 = sadd.s32 %s197, %s195
          %s199 = smul.addr %s198, 4
          %s200 = scalar_lea.vmem %s0, %s199
          %p201 = scmp.lt.s32.totalorder %s24, 0
          %s202 = scalar_select %p201, %s24, 0
        $region28: #{tpu_custom_call.1} parent=23 // pred_fallthru
          _
        // Predicated region
        $region29: #{tpu_custom_call.1} parent=23 // pred_check
          %p203 = pneg %p88
        $region30: #{tpu_custom_call.1} parent=23 // pred_check_branch
          %205 = sbr.rel (%p203) target = $region32
        $region31: #{tpu_custom_call.1} parent=23 // pred_region
          %s206 = sand.u32 %s78, 1
          %s207 = scalar_lea.sflag [#allocation4], %s206
          %s208 = sand.u32 %s78, 1
          %s209 = smul.addr %s208, 4
          %s210 = scalar_lea.vmem [#allocation3], %s209
          %s211 = sadd.s32 %s24, 1
          %p212 = scmp.lt.s32.totalorder %s211, 0
          %s213 = scalar_select %p212, %s211, 0
          %s215 = ssub.s32 64, 64
          %216 = vsyncadd %s207, %s215
          %s217 = sadd.s32 %s213, %s23
          %s218 = smul.addr %s217, 64
          %s219 = scalar_lea.hbm %s1, %s218
          %s221 = sshll.u32 %s210, 4
          %s222 = int_to_ptr.vmem [resolvable:$true] %s221
          %224 = dma.hbm_to_vmem [thread:$0]  %s219, 64, %s222, %s207
        $region32: #{tpu_custom_call.1} parent=23 // pred_fallthru
          _
      $region24: #{tpu_custom_call.1} parent=5 // pred_fallthru
        _
      %p225 = scmp.le.s32.totalorder 1, %s16
      %p226 = scmp.lt.s32.totalorder %s16, 3
      %p227 = pnand %p225, %p226
      %p228 = pneg %p227
      // Predicated region
      $region33: #{tpu_custom_call.1} parent=5 // pred_check
        _
      $region34: #{tpu_custom_call.1} parent=5 // pred_check_branch
        %230 = sbr.rel (%p227) target = $region36
      $region35: #{tpu_custom_call.1} parent=5 // pred_region
        %s231 = ssub.s32 %s16, 1
        %s232 = sand.u32 %s81, 1
        %s233 = scalar_lea.sflag [#allocation4], %s232
        %s234 = sand.u32 %s81, 1
        %s235 = smul.addr %s234, 4
        %s236 = scalar_lea.vmem [#allocation3], %s235
        // Predicated region
        $region37: #{tpu_custom_call.1} parent=35 // pred_check
          %p237 = pneg %p94
        $region38: #{tpu_custom_call.1} parent=35 // pred_check_branch
          %239 = sbr.rel (%p237) target = $region40
        $region39: #{tpu_custom_call.1} parent=35 // pred_region
          %240 = dma.done %s233, 64
        $region40: #{tpu_custom_call.1} parent=35 // pred_fallthru
          _
        %p241 = scmp.lt.s32.totalorder %s26, 0
        %s242 = scalar_select %p241, %s26, 0
        %p243 = scmp.lt.s32.totalorder %s25, 1
        %s244 = scalar_select %p243, %s25, 1
        %p245 = scmp.lt.s32.totalorder %s242, 0
        %s246 = scalar_select %p245, %s242, 0
        %s247 = sadd.s32 %s246, %s244
        %s248 = smul.addr %s247, 4
        %s249 = scalar_lea.vmem %s0, %s248
        %p250 = pneg %p60
        %p251 = pneg %p57
        %s252 = sand.u32 %s81, 1
        %s253 = scalar_lea.sflag [#allocation4], %s252
        %s254 = sand.u32 %s81, 1
        %s255 = smul.addr %s254, 4
        %s256 = scalar_lea.vmem [#allocation3], %s255
        %p257 = pneg %p94
        %p258 = pneg %p91
        %p259 = pneg %p115
        %p260 = pneg %p112
        %p261 = pneg %p136
        %p262 = pneg %p133
        %p263 = pneg %p164
        %p264 = pneg %p161
        %s265 = sand.u32 %s151, 1
        %s266 = scalar_lea.sflag [#allocation5], %s265
        %s267 = sand.u32 %s151, 1
        %s268 = smul.addr %s267, 8
        %s269 = scalar_lea.vmem [#allocation6], %s268
        %p270 = scmp.lt.s32.totalorder %s26, 0
        %s271 = scalar_select %p270, %s26, 0
        %p272 = scmp.lt.s32.totalorder %s25, 1
        %s273 = scalar_select %p272, %s25, 1
        %p274 = scmp.lt.s32.totalorder %s271, 0
        %s275 = scalar_select %p274, %s271, 0
        %s276 = sadd.s32 %s275, %s273
        %s277 = smul.addr %s276, 4
        %s278 = scalar_lea.vmem %s0, %s277
        %p279 = scmp.lt.s32.totalorder %s26, 0
        %s280 = scalar_select %p279, %s26, 0
        %s281 = sadd.s32 %s26, 1
        %p282 = scmp.lt.s32.totalorder %s281, 0
        %s283 = scalar_select %p282, %s281, 0
        %s285 = smul.u32 %s26, 128
        %v286 = vld [vmem:[%s278] sm:$0xf]
        %v287 = vpack.c.bf16 %v286, %v286
        %v288 = vlaneseq
        %v289 = vand.u32 %v288, 127
        %s290 = ssub.s32 16, %s285
        %v291 = vstv %s290
        %vm292 = vcmp.lt.s32.totalorder %v289, %v291
        %vm293 = vmpackc.low %vm292, %vm292
        %v294 = vsel %vm293, %v287, 0
        %p295 = scmp.eq.s32.totalorder %s26, 0
        // Predicated region
        $region41: #{tpu_custom_call.1} parent=35 // pred_check
          %p296 = pneg %p295
        $region42: #{tpu_custom_call.1} parent=35 // pred_check_branch
          %298 = sbr.rel (%p296) target = $region44
        $region43: #{tpu_custom_call.1} parent=35 // pred_region
          %299 = vst [vmem:[#allocation2] sm:$0x3] 0
        $region44: #{tpu_custom_call.1} parent=35 // pred_fallthru
          _
        %v300 = vld [vmem:[#allocation2] sm:$0x3]
        %v301 = vld [vmem:[%s236] sm:$0xf]
        %v302 = vpack.c.bf16 %v301, %v301
        %s303 = ssub.s32 4294967184, %s285
        %v304 = vstv %s303
        %vm305 = vcmp.lt.s32.totalorder %v289, %v304
        %vm306 = vmpackc.low %vm305, %vm305
        %v307 = vsel %vm306, %v302, 0
        %v310 = vunpack.c.l.s4 1983009808
        %v311 = vunpack.c.0.s8 %v310
        %v312 = vlaneseq
        %v313 = vshrl.u32 %v312, 7
        %v314 = vsub.s32 %v311, %v313
        %v315 = vrot.slane %v300, %v314
        %316 = vrot.lane.b32.xlu0 %v315, 1
        %v317 = vpop.permute.xlu0 %316
        %319 = vrot.lane.b32.xlu0 %v294, 1
        %v320 = vpop.permute.xlu0 %319
        %322 = vrot.lane.b32.xlu0 %v307, 1
        %v323 = vpop.permute.xlu0 %322
        %vm324 = vcmask 7168
        %v327 = vsel %vm324, %v317, %v320
        %v329 = vsel %vm324, %v320, %v323
        %v332 = vrot.slane %v327, 6
        %v333 = vrot.slane %v329, 6
        %334 = vrot.lane.b32.xlu0 %v332, 127
        %v335 = vpop.permute.xlu0 %334
        %336 = vrot.lane.b32.xlu0 %v333, 127
        %v337 = vpop.permute.xlu0 %336
        %vm338 = vcmask 1039360
        %v339 = vsel %vm338, %v335, %v337
        %v340 = vrot.slane %v327, 4
        %v341 = vrot.slane %v329, 4
        %342 = vrot.lane.b32.xlu0 %v340, 126
        %v343 = vpop.permute.xlu0 %342
        %344 = vrot.lane.b32.xlu0 %v341, 126
        %v345 = vpop.permute.xlu0 %344
        %vm346 = vcmask 1031168
        %v347 = vsel %vm346, %v343, %v345
        %vm348 = vcmask 1041408
        %v350 = vsel %vm348, %v327, %v339
        %vm351 = vcmask 1043456
        %v353 = vsel %vm351, %v350, %v347
        %v354 = vld [vmem:[%s2] sm:$0xf]
        %v355 = vld [vmem:[%s3] sm:$0xff]
        %357 = vset.pattern.permute.xlu0 0
        %358 = vperm.xlu0 %357, %v355
        %v359 = vpop.permute.xlu0 %358
        %vm361 = vcmask 97280
        %v363 = vsel %vm361, %v354, 0
        %vm365 = vcmask 1045504
        %v366 = vsel %vm365, %v353, 0
        %368 = vmatprep.subr.bf16.mxu0 0
        %369 = vmatpush1.bf16.msra.mxu0 %v366
        %370 = vmatprep.subr.bf16.mxu0 0
        %371 = vmatpush1.bf16.msra.mxu0 0
        %372 = vmatprep.subr.bf16.mxu0 0
        %373 = vmatpush1.bf16.msra.mxu0 0
        %374 = vmatprep.subr.bf16.mxu0 0
        %375 = vmatpush1.bf16.msra.mxu0 0
        %376 = vmatprep.subr.bf16.mxu0 0
        %377 = vmatpush1.bf16.msra.mxu0 0
        %378 = vmatprep.subr.bf16.mxu0 0
        %379 = vmatpush1.bf16.msra.mxu0 0
        %380 = vmatprep.subr.bf16.mxu0 0
        %381 = vmatpush1.bf16.msra.mxu0 0
        %382 = vmatprep.subr.bf16.mxu0 0
        %383 = vmatpush1.bf16.msra.mxu0 0
        %384 = vmatprep.subr.bf16.mxu0 0
        %385 = vmatpush1.bf16.msra.mxu0 0
        %386 = vmatprep.subr.bf16.mxu0 0
        %387 = vmatpush1.bf16.msra.mxu0 0
        %388 = vmatprep.subr.bf16.mxu0 0
        %389 = vmatpush1.bf16.msra.mxu0 0
        %390 = vmatprep.subr.bf16.mxu0 0
        %391 = vmatpush1.bf16.msra.mxu0 0
        %392 = vmatprep.subr.bf16.mxu0 0
        %393 = vmatpush1.bf16.msra.mxu0 0
        %394 = vmatprep.subr.bf16.mxu0 0
        %395 = vmatpush1.bf16.msra.mxu0 0
        %396 = vmatprep.subr.bf16.mxu0 0
        %397 = vmatpush1.bf16.msra.mxu0 0
        %398 = vmatprep.subr.bf16.mxu0 0
        %399 = vmatpush1.bf16.msra.mxu0 0
        %400 = vmatprep.mubr.bf16.mxu0 0
        %401 = vmatmul.mubr.bf16.gmra.mrb[0].mxu0 %v363
        %v402 = vpop.f32.mrb[0].mxu0
        %v403 = vadd.f32 %v359, %v402
        %v404 = vpop.f32.mrb[0].mxu0
        %v405 = vpop.f32.mrb[0].mxu0
        %v406 = vpop.f32.mrb[0].mxu0
        %407 = vdwg.mxu0
        %408 = vst [vmem:[%s269] sm:$0xff] %v403
        %409 = vst [vmem:[#allocation2] sm:$0x3] %v294
        %s410 = sand.u32 %s151, 1
        %s411 = scalar_lea.sflag [#allocation5], %s410
        %s412 = sand.u32 %s151, 1
        %s413 = smul.addr %s412, 8
        %s414 = scalar_lea.vmem [#allocation6], %s413
        // Predicated region
        $region45: #{tpu_custom_call.1} parent=35 // pred_check
          %p415 = pneg %p161
        $region46: #{tpu_custom_call.1} parent=35 // pred_check_branch
          %417 = sbr.rel (%p415) target = $region48
        $region47: #{tpu_custom_call.1} parent=35 // pred_region
          %s419 = ssub.s32 128, 128
          %420 = vsyncadd %s411, %s419
          %s421 = sadd.s32 %s26, %s25
          %s422 = smul.addr %s421, 128
          %s423 = scalar_lea.hbm %s4, %s422
          %s425 = sshll.u32 %s414, 4
          %s426 = int_to_ptr.vmem [resolvable:$true] %s425
          %428 = dma.vmem_to_hbm [thread:$0]  %s426, 128, %s423, %s411
        $region48: #{tpu_custom_call.1} parent=35 // pred_fallthru
          _
      $region36: #{tpu_custom_call.1} parent=5 // pred_fallthru
        _
      %p429 = scmp.le.s32.totalorder 2, %s16
      // Predicated region
      $region49: #{tpu_custom_call.1} parent=5 // pred_check
        %p430 = pneg %p429
      $region50: #{tpu_custom_call.1} parent=5 // pred_check_branch
        %432 = sbr.rel (%p430) target = $region52
      $region51: #{tpu_custom_call.1} parent=5 // pred_region
        %s433 = ssub.s32 %s16, 2
        // Predicated region
        $region53: #{tpu_custom_call.1} parent=51 // pred_check
          %p434 = pneg %p167
        $region54: #{tpu_custom_call.1} parent=51 // pred_check_branch
          %436 = sbr.rel (%p434) target = $region56
        $region55: #{tpu_custom_call.1} parent=51 // pred_region
          %s437 = sand.u32 %s152, 1
          %s438 = scalar_lea.sflag [#allocation5], %s437
          %s439 = sand.u32 %s152, 1
          %s440 = smul.addr %s439, 8
          %s441 = scalar_lea.vmem [#allocation6], %s440
          %442 = dma.done %s438, 128
        $region56: #{tpu_custom_call.1} parent=51 // pred_fallthru
          _
      $region52: #{tpu_custom_call.1} parent=5 // pred_fallthru
        _
    $region6: #{tpu_custom_call.1} parent=1 // loop_footer
      %s20 = sadd.s32 1, %s16
    $region7: #{tpu_custom_call.1} parent=1 // loop_footer_branch
      %15 = sbr.rel target = $region3
    $region8: #{tpu_custom_call.1} parent=1 // loop_exit
      _
    %443 = vsyncpa [#allocation4], 1
    %s444 = scalar_lea.sflag [#allocation4], 1
    %445 = vsyncpa %s444, 1
    %446 = vsyncpa [#allocation5], 1
    %s447 = scalar_lea.sflag [#allocation5], 1
    %448 = vsyncpa %s447, 1

</llo_original>
